<compile_context>
chip_gen: v6e
topology: v6e:2x2x1
jax: 0.10.0
libtpu: 0.0.40
codegen_flags: <defaults>
</compile_context>

<pallas_src>
import jax
import jax.numpy as jnp
from jax.experimental import pallas as pl
from jax.experimental.pallas import tpu as pltpu

NEG_INF = -1e30  # same constant mask_logits uses in the reference repo


def relation_attention_kernel(dep_ref, feat_ref, dmask_ref,
                              w1_ref, b1_ref, w2_ref, out_ref):
    TB, L, D = feat_ref.shape            # feature block  (TB, L, D)  bf16
    # dep_ref holds the same TB batch rows, pre-flattened to token rows
    # (TB*L, D), so fc1 is one big MXU matmul.

    # ---- fc1 + ReLU ---------------------------------------------------------
    h = jnp.dot(dep_ref[...], w1_ref[...],
                preferred_element_type=jnp.float32)               # (TB*L, H) f32
    h = jnp.maximum(h + b1_ref[...], 0.0)

    # ---- fc2 (output width 1): VPU multiply + lane reduce -------------------
    # (a (H,1) MXU matvec would waste 127/128 result lanes; fc2 bias omitted
    #  because softmax is shift-invariant.)
    logits = jnp.sum(h * w2_ref[...], axis=-1, keepdims=True)     # (TB*L, 1)

    # ---- mask_logits + softmax over L within each batch row -----------------
    dm = dmask_ref[...]                                           # (TB*L, 1)
    masked = logits * dm + (1.0 - dm) * NEG_INF
    masked = jnp.reshape(masked, (TB, L, 1))                      # group by batch row
    m = jnp.max(masked, axis=1, keepdims=True)                    # (TB, 1, 1)
    e = jnp.exp(masked - m)                                       # (TB, L, 1)
    attn = e / jnp.sum(e, axis=1, keepdims=True)                  # (TB, L, 1)

    # ---- out[b, :] = sum_l attn[b, l] * feature[b, l, :] ---------------------
    feat = feat_ref[...].astype(jnp.float32)                      # (TB, L, D)
    out_ref[...] = jnp.sum(feat * attn, axis=1)                   # (TB, D) f32


def _round_up(x, m):
    return (x + m - 1) // m * m


def _choose_batch_block(N, L, D, H, in_itemsize,
                        vmem_budget_bytes=16 * 1024 * 1024,
                        max_tb=1024):
    """Pick how many batch rows to process per grid step (VMEM-budgeted)."""
    sub_in = {4: 8, 2: 16, 1: 32}.get(in_itemsize, 8)   # sublanes per VMEM tile
    Dp = _round_up(D, 128)
    Hp = _round_up(H, 128)
    Lp_in = _round_up(L, sub_in)
    per_row = (
        2 * L * Dp * in_itemsize           # dep token rows, double-buffered
        + 2 * Lp_in * Dp * in_itemsize     # feature block, double-buffered
        + 2 * L * 128 * 4                  # dmask column block (128-lane pad)
        + 2 * Dp * 4                       # output block, double-buffered
        + 3 * L * Hp * 4                   # f32 intermediates (h, h*w2, exp)
        + _round_up(L, 8) * Dp * 4         # f32 copy of the feature block
    )
    tb = int(max(1, vmem_budget_bytes // per_row))
    tb = min(tb, max_tb)
    if tb >= N:
        if N >= 16 and N % 16 == 0 and N // 2 <= max_tb:
            return N // 2                  # >= 2 grid steps so both v7x TCs work
        return N
    return max(8, (tb // 8) * 8)           # keep sublane-dim blocks 8-aligned


def relation_attention(feature, dep_tags_v, dmask, w1, b1, w2,
                       *, stream_dtype=jnp.bfloat16, batch_block=None):
    """Pallas forward of RelationAttention.

    feature     [N, L, D], dep_tags_v [N, L, D], dmask [N, L] (1=valid, 0=pad)
    w1 [D, H], b1 [H]  (fc1, weight stored transposed: x @ w1 + b1)
    w2 [H, 1]          (fc2; its bias is a softmax no-op and is dropped)
    returns     [N, D] float32
    """
    N, L, D = feature.shape
    H = w1.shape[1]
    in_itemsize = jnp.dtype(stream_dtype).itemsize

    TB = batch_block if batch_block is not None else _choose_batch_block(
        N, L, D, H, in_itemsize)
    grid = (pl.cdiv(N, TB),)

    # Free, layout-preserving host-side reshapes/casts (no extra HBM pass):
    dep2d = dep_tags_v.astype(stream_dtype).reshape(N * L, D)    # token rows
    feat3d = feature.astype(stream_dtype)
    dmask_col = dmask.astype(jnp.float32).reshape(N * L, 1)      # column layout
    w1_s = w1.astype(stream_dtype)
    b1_row = b1.reshape(1, H).astype(jnp.float32)
    w2_row = w2.reshape(1, H).astype(jnp.float32)

    return pl.pallas_call(
        relation_attention_kernel,
        out_shape=jax.ShapeDtypeStruct((N, D), jnp.float32),
        grid_spec=pltpu.PrefetchScalarGridSpec(
            num_scalar_prefetch=0,
            grid=grid,
            in_specs=[
                pl.BlockSpec((TB * L, D), lambda n: (n, 0)),     # dep token rows
                pl.BlockSpec((TB, L, D), lambda n: (n, 0, 0)),   # feature
                pl.BlockSpec((TB * L, 1), lambda n: (n, 0)),     # dmask column
                pl.BlockSpec((D, H), lambda n: (0, 0)),          # fc1 weight
                pl.BlockSpec((1, H), lambda n: (0, 0)),          # fc1 bias
                pl.BlockSpec((1, H), lambda n: (0, 0)),          # fc2 weight row
            ],
            # TODO(synk): if D < 128 in production configs, pack the (TB, D)
            # output slab so its last dim is a multiple of 128 (avoids masked
            # vst.msk partial stores).
            out_specs=pl.BlockSpec((TB, D), lambda n: (n, 0)),
        ),
        compiler_params=pltpu.CompilerParams(
            dimension_semantics=("parallel",),
            vmem_limit_bytes=48 * 1024 * 1024,
        ),
    )(dep2d, feat3d, dmask_col, w1_s, b1_row, w2_row)


if __name__ == "__main__":
    # Small shapes consistent with the module: N batch, L seq, D in_dim, H hidden.
    N, L, D, H = 2, 8, 32, 64

    key = jax.random.PRNGKey(0)
    k1, k2, k3, k4, k5, k6 = jax.random.split(key, 6)

    feature = jax.random.normal(k1, (N, L, D), dtype=jnp.float32)
    dep_tags_v = jax.random.normal(k2, (N, L, D), dtype=jnp.float32)
    # mask: first 6 positions valid in batch 0, all 8 valid in batch 1
    lengths = jnp.array([[6], [8]], dtype=jnp.int32)
    dmask = (jnp.arange(L)[None, :] < lengths).astype(jnp.float32)

    # Deterministic nn.Linear-style init (uniform +/- 1/sqrt(fan_in))
    bound1 = 1.0 / (D ** 0.5)
    w1 = jax.random.uniform(k3, (D, H), jnp.float32, -bound1, bound1)  # fc1.weight.T
    b1 = jax.random.uniform(k4, (H,), jnp.float32, -bound1, bound1)
    bound2 = 1.0 / (H ** 0.5)
    w2 = jax.random.uniform(k5, (H, 1), jnp.float32, -bound2, bound2)  # fc2.weight.T
    b2 = jax.random.uniform(k6, (1,), jnp.float32, -bound2, bound2)

    out = relation_attention(feature, dep_tags_v, dmask, w1, b1, w2)
    out = jax.block_until_ready(out)

    # Pure-JAX reference, using the same bf16 rounding of the streamed operands.
    # b2 is kept in the reference to demonstrate it cannot change the result
    # (softmax is shift-invariant over the valid positions).
    dep_b = dep_tags_v.astype(jnp.bfloat16).astype(jnp.float32)
    feat_b = feature.astype(jnp.bfloat16).astype(jnp.float32)
    w1_b = w1.astype(jnp.bfloat16).astype(jnp.float32)
    h_ref = jnp.maximum(
        jnp.einsum("nld,dh->nlh", dep_b, w1_b,
                   precision=jax.lax.Precision.HIGHEST) + b1, 0.0)
    logits_ref = jnp.einsum("nlh,h->nl", h_ref, w2[:, 0],
                            precision=jax.lax.Precision.HIGHEST) + b2[0]
    masked_ref = logits_ref * dmask + (1.0 - dmask) * NEG_INF
    attn_ref = jax.nn.softmax(masked_ref, axis=1)
    ref = jnp.sum(feat_b * attn_ref[:, :, None], axis=1)

    assert out.shape == (N, D)
    assert jnp.allclose(out, ref, atol=2e-3, rtol=2e-3), (
        "mismatch vs reference: max abs err = "
        f"{jnp.max(jnp.abs(out - ref))}")
    print("KERNEL_OK")
</pallas_src>

<mosaic_0001>
module attributes {stable_mosaic.version = 11 : i64} {
  func.func @relation_attention_kernel(%arg0: i32, %arg1: memref<16x32xbf16, #tpu.memory_space<vmem>>, %arg2: memref<2x8x32xbf16, #tpu.memory_space<vmem>>, %arg3: memref<16x1xf32, #tpu.memory_space<vmem>>, %arg4: memref<32x64xbf16, #tpu.memory_space<vmem>>, %arg5: memref<1x64xf32, #tpu.memory_space<vmem>>, %arg6: memref<1x64xf32, #tpu.memory_space<vmem>>, %arg7: memref<2x32xf32, #tpu.memory_space<vmem>>) attributes {dimension_semantics = [#tpu.dimension_semantics<parallel>], iteration_bounds = array<i64: 1>, scalar_prefetch = 0 : i64, scratch_operands = 0 : i64, tpu.core_type = #tpu.core_type<tc>, window_params = [{transform_indices = @transform_0, window_bounds = array<i64: 16, 32>}, {transform_indices = @transform_1, window_bounds = array<i64: 2, 8, 32>}, {transform_indices = @transform_2, window_bounds = array<i64: 16, 1>}, {pipeline_mode = #tpu.pipeline_mode<synchronous>, transform_indices = @transform_3, window_bounds = array<i64: 32, 64>}, {pipeline_mode = #tpu.pipeline_mode<synchronous>, transform_indices = @transform_4, window_bounds = array<i64: 1, 64>}, {pipeline_mode = #tpu.pipeline_mode<synchronous>, transform_indices = @transform_5, window_bounds = array<i64: 1, 64>}, {transform_indices = @transform_6, window_bounds = array<i64: 2, 32>}]} {
    %c0 = arith.constant 0 : index
    %c0_0 = arith.constant 0 : index
    %0 = vector.load %arg1[%c0, %c0_0] : memref<16x32xbf16, #tpu.memory_space<vmem>>, vector<16x32xbf16>
    %c0_1 = arith.constant 0 : index
    %c0_2 = arith.constant 0 : index
    %1 = vector.load %arg4[%c0_1, %c0_2] : memref<32x64xbf16, #tpu.memory_space<vmem>>, vector<32x64xbf16>
    %cst = arith.constant dense<0.000000e+00> : vector<16x64xf32>
    %2 = tpu.matmul %0, %1, %cst {dimension_numbers = #tpu.dot_dimension_numbers<[1], [0], [0], [1], [0, 0, 1, 1], [], []>} : vector<16x32xbf16>, vector<32x64xbf16>, vector<16x64xf32> -> vector<16x64xf32>
    %c0_3 = arith.constant 0 : index
    %c0_4 = arith.constant 0 : index
    %3 = vector.load %arg5[%c0_3, %c0_4] : memref<1x64xf32, #tpu.memory_space<vmem>>, vector<1x64xf32>
    %4 = vector.broadcast %3 : vector<1x64xf32> to vector<16x64xf32>
    %5 = arith.addf %2, %4 : vector<16x64xf32>
    %cst_5 = arith.constant 0.000000e+00 : f32
    %6 = vector.broadcast %cst_5 : f32 to vector<16x64xf32>
    %7 = arith.maximumf %5, %6 : vector<16x64xf32>
    %c0_6 = arith.constant 0 : index
    %c0_7 = arith.constant 0 : index
    %8 = vector.load %arg6[%c0_6, %c0_7] : memref<1x64xf32, #tpu.memory_space<vmem>>, vector<1x64xf32>
    %9 = vector.broadcast %8 : vector<1x64xf32> to vector<16x64xf32>
    %10 = arith.mulf %7, %9 : vector<16x64xf32>
    %cst_8 = arith.constant dense<0.000000e+00> : vector<16xf32>
    %11 = vector.multi_reduction <add>, %10, %cst_8 [1] : vector<16x64xf32> to vector<16xf32>
    %12 = vector.shape_cast %11 : vector<16xf32> to vector<16x1xf32>
    %c0_9 = arith.constant 0 : index
    %c0_10 = arith.constant 0 : index
    %13 = vector.load %arg3[%c0_9, %c0_10] : memref<16x1xf32, #tpu.memory_space<vmem>>, vector<16x1xf32>
    %14 = arith.mulf %12, %13 : vector<16x1xf32>
    %cst_11 = arith.constant 1.000000e+00 : f32
    %15 = vector.broadcast %cst_11 : f32 to vector<16x1xf32>
    %16 = arith.subf %15, %13 : vector<16x1xf32>
    %cst_12 = arith.constant -1.000000e+30 : f32
    %17 = vector.broadcast %cst_12 : f32 to vector<16x1xf32>
    %18 = arith.mulf %16, %17 : vector<16x1xf32>
    %19 = arith.addf %14, %18 : vector<16x1xf32>
    %20 = vector.shape_cast %19 : vector<16x1xf32> to vector<2x8x1xf32>
    %cst_13 = arith.constant dense<0xFF800000> : vector<2x1xf32>
    %21 = vector.multi_reduction <maximumf>, %20, %cst_13 [1] : vector<2x8x1xf32> to vector<2x1xf32>
    %22 = vector.shape_cast %21 : vector<2x1xf32> to vector<2x1x1xf32>
    %23 = vector.broadcast %22 : vector<2x1x1xf32> to vector<2x8x1xf32>
    %24 = arith.subf %20, %23 : vector<2x8x1xf32>
    %25 = math.exp %24 : vector<2x8x1xf32>
    %cst_14 = arith.constant dense<0.000000e+00> : vector<2x1xf32>
    %26 = vector.multi_reduction <add>, %25, %cst_14 [1] : vector<2x8x1xf32> to vector<2x1xf32>
    %27 = vector.shape_cast %26 : vector<2x1xf32> to vector<2x1x1xf32>
    %28 = vector.broadcast %27 : vector<2x1x1xf32> to vector<2x8x1xf32>
    %29 = arith.divf %25, %28 : vector<2x8x1xf32>
    %c0_15 = arith.constant 0 : index
    %c0_16 = arith.constant 0 : index
    %c0_17 = arith.constant 0 : index
    %30 = vector.load %arg2[%c0_15, %c0_16, %c0_17] : memref<2x8x32xbf16, #tpu.memory_space<vmem>>, vector<2x8x32xbf16>
    %31 = arith.extf %30 : vector<2x8x32xbf16> to vector<2x8x32xf32>
    %32 = vector.broadcast %29 : vector<2x8x1xf32> to vector<2x8x32xf32>
    %33 = arith.mulf %31, %32 : vector<2x8x32xf32>
    %cst_18 = arith.constant dense<0.000000e+00> : vector<2x32xf32>
    %34 = vector.multi_reduction <add>, %33, %cst_18 [1] : vector<2x8x32xf32> to vector<2x32xf32>
    %c0_19 = arith.constant 0 : index
    %c0_20 = arith.constant 0 : index
    %35 = vector.load %arg7[%c0_19, %c0_20] : memref<2x32xf32, #tpu.memory_space<vmem>>, vector<2x32xf32>
    tpu.vector_store %arg7[%c0_19, %c0_20], %34 {strides = array<i32>} : memref<2x32xf32, #tpu.memory_space<vmem>>, vector<2x32xf32>,
    return
  }
  func.func @transform_0(%arg0: i32) -> (i32, i32) {
    %c0_i32 = arith.constant 0 : i32
    %c0_i32_0 = arith.constant 0 : i32
    return %arg0, %c0_i32 : i32, i32
  }
  func.func @transform_1(%arg0: i32) -> (i32, i32, i32) {
    %c0_i32 = arith.constant 0 : i32
    %c0_i32_0 = arith.constant 0 : i32
    %c0_i32_1 = arith.constant 0 : i32
    return %arg0, %c0_i32, %c0_i32_0 : i32, i32, i32
  }
  func.func @transform_2(%arg0: i32) -> (i32, i32) {
    %c0_i32 = arith.constant 0 : i32
    %c0_i32_0 = arith.constant 0 : i32
    return %arg0, %c0_i32 : i32, i32
  }
  func.func @transform_3(%arg0: i32) -> (i32, i32) {
    %c0_i32 = arith.constant 0 : i32
    %c0_i32_0 = arith.constant 0 : i32
    %c0_i32_1 = arith.constant 0 : i32
    return %c0_i32, %c0_i32_0 : i32, i32
  }
  func.func @transform_4(%arg0: i32) -> (i32, i32) {
    %c0_i32 = arith.constant 0 : i32
    %c0_i32_0 = arith.constant 0 : i32
    %c0_i32_1 = arith.constant 0 : i32
    return %c0_i32, %c0_i32_0 : i32, i32
  }
  func.func @transform_5(%arg0: i32) -> (i32, i32) {
    %c0_i32 = arith.constant 0 : i32
    %c0_i32_0 = arith.constant 0 : i32
    %c0_i32_1 = arith.constant 0 : i32
    return %c0_i32, %c0_i32_0 : i32, i32
  }
  func.func @transform_6(%arg0: i32) -> (i32, i32) {
    %c0_i32 = arith.constant 0 : i32
    %c0_i32_0 = arith.constant 0 : i32
    return %arg0, %c0_i32 : i32, i32
  }
}

</mosaic_0001>

<llo_original>
// kernel: tpu_custom_call.1
$region0: #{tpu_custom_call.1}
  #allocation0 [shape = 'u32[]', space=smem, size = 0x4, offset = 0x4, fixed_abs, tag = 'smem constant byte address 0x4 - core index']
  #allocation1 [shape = 'u32[144,128]{1,0:T(1,128)}', space=vmem, size = 0x12000, scoped, tag = 'internal scratch']
  %s0 = inlined_call_operand.hbm [shape: bf16[16,32], index: 0, kind: input, shape index: {}]
  %s1 = inlined_call_operand.hbm [shape: bf16[2,8,32], index: 1, kind: input, shape index: {}]
  %s2 = inlined_call_operand.vmem [shape: f32[16,1], index: 2, kind: input, shape index: {}]
  %s3 = inlined_call_operand.vmem [shape: bf16[32,64], index: 3, kind: input, shape index: {}]
  %s4 = inlined_call_operand.vmem [shape: f32[1,64], index: 4, kind: input, shape index: {}]
  %s5 = inlined_call_operand.vmem [shape: f32[1,64], index: 5, kind: input, shape index: {}]
  %s6 = inlined_call_operand.hbm [shape: f32[2,32], index: 6, kind: output, shape index: {}]
  %s7 = sld [smem:[#allocation0]]
  $region42: #{tpu_custom_call.1} parent=0
    _
  %s9 = ssub.s32 1, %s7
  %s10 = scalar_select 0, %s9, %s7
  $region1: #{tpu_custom_call.1} parent=0
    #allocation2 [shape = 'u8[4096]{0}', space=vmem, size = 0x1000, scoped, tag = 'input window, operand 0, single buffered']
    #allocation3 [shape = 's32[1]{0}', space=sflag, size = 0x4, scoped, tag = 'scoped memory for tpu_custom_call.1']
    #allocation4 [shape = 's32[1]{0}', space=sflag, size = 0x4, scoped, tag = 'scoped memory for tpu_custom_call.1']
    #allocation5 [shape = 'u8[4096]{0}', space=vmem, size = 0x1000, scoped, tag = 'input window, operand 1, single buffered']
    #allocation6 [shape = 's32[1]{0}', space=sflag, size = 0x4, scoped, tag = 'scoped memory for tpu_custom_call.1']
    #allocation7 [shape = 'u8[1024]{0}', space=vmem, size = 0x400, scoped, tag = 'output window, operand 0, single buffered']
    %11 = vsyncpa [#allocation3], 0
    %12 = vsyncpa [#allocation6], 0
    %13 = vsyncpa [#allocation4], 0
    // Predicated region
    $region2: #{tpu_custom_call.1} parent=1 // pred_check
      _
    $region3: #{tpu_custom_call.1} parent=1 // pred_check_branch
      %15 = sbr.rel (0) target = $region5
    $region4: #{tpu_custom_call.1} parent=1 // pred_region
      %s17 = ssub.s32 128, 128
      %18 = vsyncadd [#allocation3], %s17
      %s19 = sshll.u32 [#allocation2], 4
      %s20 = int_to_ptr.vmem [resolvable:$true] %s19
      %25 = dma.hbm_to_vmem [thread:$0]  %s0, 128, %s20, [#allocation3], 64, 64, 4
    $region5: #{tpu_custom_call.1} parent=1 // pred_fallthru
      _
    // Predicated region
    $region6: #{tpu_custom_call.1} parent=1 // pred_check
      _
    $region7: #{tpu_custom_call.1} parent=1 // pred_check_branch
      %27 = sbr.rel (0) target = $region9
    $region8: #{tpu_custom_call.1} parent=1 // pred_region
      %s29 = ssub.s32 128, 128
      %30 = vsyncadd [#allocation6], %s29
      %s31 = sshll.u32 [#allocation5], 4
      %s32 = int_to_ptr.vmem [resolvable:$true] %s31
      %37 = dma.hbm_to_vmem [thread:$0]  %s1, 128, %s32, [#allocation6], 64, 64, 4
    $region9: #{tpu_custom_call.1} parent=1 // pred_fallthru
      _
    // Predicated region
    $region10: #{tpu_custom_call.1} parent=1 // pred_check
      _
    $region11: #{tpu_custom_call.1} parent=1 // pred_check_branch
      %39 = sbr.rel (0) target = $region13
    $region12: #{tpu_custom_call.1} parent=1 // pred_region
      _
    $region13: #{tpu_custom_call.1} parent=1 // pred_fallthru
      _
    // Predicated region
    $region14: #{tpu_custom_call.1} parent=1 // pred_check
      _
    $region15: #{tpu_custom_call.1} parent=1 // pred_check_branch
      %41 = sbr.rel (0) target = $region17
    $region16: #{tpu_custom_call.1} parent=1 // pred_region
      _
    $region17: #{tpu_custom_call.1} parent=1 // pred_fallthru
      _
    // Predicated region
    $region18: #{tpu_custom_call.1} parent=1 // pred_check
      _
    $region19: #{tpu_custom_call.1} parent=1 // pred_check_branch
      %43 = sbr.rel (0) target = $region21
    $region20: #{tpu_custom_call.1} parent=1 // pred_region
      _
    $region21: #{tpu_custom_call.1} parent=1 // pred_fallthru
      _
    // Predicated region
    $region22: #{tpu_custom_call.1} parent=1 // pred_check
      _
    $region23: #{tpu_custom_call.1} parent=1 // pred_check_branch
      %45 = sbr.rel (0) target = $region25
    $region24: #{tpu_custom_call.1} parent=1 // pred_region
      _
    $region25: #{tpu_custom_call.1} parent=1 // pred_fallthru
      _
    // Predicated region
    $region26: #{tpu_custom_call.1} parent=1 // pred_check
      _
    $region27: #{tpu_custom_call.1} parent=1 // pred_check_branch
      %47 = sbr.rel (0) target = $region29
    $region28: #{tpu_custom_call.1} parent=1 // pred_region
      %48 = dma.done [#allocation3], 128
    $region29: #{tpu_custom_call.1} parent=1 // pred_fallthru
      _
    // Predicated region
    $region30: #{tpu_custom_call.1} parent=1 // pred_check
      _
    $region31: #{tpu_custom_call.1} parent=1 // pred_check_branch
      %50 = sbr.rel (0) target = $region33
    $region32: #{tpu_custom_call.1} parent=1 // pred_region
      %51 = dma.done [#allocation6], 128
    $region33: #{tpu_custom_call.1} parent=1 // pred_fallthru
      _
    %v53 = vld [vmem:[#allocation2] sm:$0xf]
    %v54 = vld [vmem:[#allocation2 + $0x4] sm:$0xf]
    %v55 = vld [vmem:[%s3] sm:$0xf]
    %v56 = vld [vmem:[%s3 + $0x4] sm:$0xf]
    %v57 = vld [vmem:[%s3 + $0x8] sm:$0xf]
    %v58 = vld [vmem:[%s3 + $0xc] sm:$0xf]
    %v59 = vld [vmem:[%s4] sm:$0x1]
    %v61 = vlaneseq
    %v62 = vshrl.u32 %v61, 7
    %v63 = vsub.s32 0, %v62
    %v64 = vrot.slane %v59, %v63
    %v68 = vunpack.c.l.b16 %v53
    %v69 = vunpack.c.l.b16 %v54
    %v70 = vpack.c.b16 %v69, %v68
    %v75 = vunpack.c.l.b16 %v55
    %v76 = vunpack.c.l.b16 %v56
    %v77 = vunpack.c.l.b16 %v57
    %v78 = vunpack.c.l.b16 %v58
    %v79 = vpack.c.b16 %v76, %v75
    %v80 = vpack.c.b16 %v78, %v77
    %vm83 = vcmask 261120
    %v85 = vsel %vm83, %v70, 0
    %87 = vmatprep.subr.bf16.mxu0 0
    %88 = vmatpush1.bf16.msra.mxu0 0
    %89 = vmatprep.subr.bf16.mxu0 0
    %90 = vmatpush1.bf16.msra.mxu0 0
    %91 = vmatprep.subr.bf16.mxu0 0
    %92 = vmatpush1.bf16.msra.mxu0 0
    %93 = vmatprep.subr.bf16.mxu0 0
    %94 = vmatpush1.bf16.msra.mxu0 0
    %95 = vmatprep.subr.bf16.mxu0 0
    %96 = vmatpush1.bf16.msra.mxu0 0
    %97 = vmatprep.subr.bf16.mxu0 0
    %98 = vmatpush1.bf16.msra.mxu0 0
    %99 = vmatprep.subr.bf16.mxu0 0
    %100 = vmatpush1.bf16.msra.mxu0 %v80
    %101 = vmatprep.subr.bf16.mxu0 0
    %102 = vmatpush1.bf16.msra.mxu0 %v79
    %103 = vmatprep.subr.bf16.mxu0 0
    %104 = vmatpush2.bf16.msra.mxu0 0
    %105 = vmatprep.subr.bf16.mxu0 0
    %106 = vmatpush2.bf16.msra.mxu0 0
    %107 = vmatprep.subr.bf16.mxu0 0
    %108 = vmatpush2.bf16.msra.mxu0 0
    %109 = vmatprep.subr.bf16.mxu0 0
    %110 = vmatpush2.bf16.msra.mxu0 0
    %111 = vmatprep.subr.bf16.mxu0 0
    %112 = vmatpush2.bf16.msra.mxu0 0
    %113 = vmatprep.subr.bf16.mxu0 0
    %114 = vmatpush2.bf16.msra.mxu0 0
    %115 = vmatprep.subr.bf16.mxu0 0
    %116 = vmatpush2.bf16.msra.mxu0 0
    %117 = vmatprep.subr.bf16.mxu0 0
    %118 = vmatpush2.bf16.msra.mxu0 0
    %119 = vmatprep.mubr.bf16.mxu0 0
    %120 = vmatmul.mubr.bf16.gmra.mxu0 %v85
    %v121 = vpop.f32.mrf.mxu0
    %v122 = vadd.f32 %v64, %v121
    %v123 = vpop.f32.mrf.mxu0
    %v124 = vpop.f32.mrf.mxu0
    %v125 = vadd.f32 %v64, %v124
    %v126 = vpop.f32.mrf.mxu0
    %127 = vdwg.mxu0
    %v128 = vmax.f32 %v122, 0.0
    %v129 = vmax.f32 %v125, 0.0
    %v130 = vld [vmem:[%s5] sm:$0x1]
    %v132 = vlaneseq
    %v133 = vshrl.u32 %v132, 7
    %v134 = vsub.s32 0, %v133
    %v135 = vrot.slane %v130, %v134
    %v137 = vmul.f32 %v128, %v135
    %v138 = vmul.f32 %v129, %v135
    %vm139 = vcmask 523264
    %v140 = vsel %vm139, %v137, 0.0
    %141 = vadd.xlane.f32.xlu0 %v140
    %v142 = vpop.xlane.xlu0 %141
    %v143 = vsel %vm139, %v138, 0.0
    %144 = vadd.xlane.f32.xlu0 %v143
    %v145 = vpop.xlane.xlu0 %144
    %v146 = vld [vmem:[%s2] sm:$0xff]
    %v147 = vld [vmem:[%s2 + $0x8] sm:$0xff]
    %v148 = vmul.f32 %v142, %v146
    %v149 = vmul.f32 %v145, %v147
    %v150 = vsub.f32 1.0, %v146
    %v151 = vsub.f32 1.0, %v147
    %v152 = vmul.f32 %v150, -1e+30
    %v153 = vmul.f32 %v151, -1e+30
    %v154 = vadd.f32 %v148, %v152
    %v155 = vadd.f32 %v149, %v153
    %vm156 = vcmask 7168
    %v157 = vsel %vm156, %v154, -inf
    %v158 = vrot.slane %v157, 4
    %v159 = vmax.f32 %v157, %v158
    %v160 = vrot.slane %v159, 2
    %v161 = vmax.f32 %v159, %v160
    %v162 = vrot.slane %v161, 1
    %v163 = vmax.f32 %v161, %v162
    %v164 = vsel %vm156, %v155, -inf
    %v165 = vrot.slane %v164, 4
    %v166 = vmax.f32 %v164, %v165
    %v167 = vrot.slane %v166, 2
    %v168 = vmax.f32 %v166, %v167
    %v169 = vrot.slane %v168, 1
    %v170 = vmax.f32 %v168, %v169
    %v171 = vsub.f32 %v154, %v163
    %v172 = vsub.f32 %v155, %v170
    %v173 = vmul.f32 %v171, 1.442695
    %v174 = vpow.pop %v173
    %v175 = vmul.f32 %v172, 1.442695
    %v176 = vpow.pop %v175
    %v177 = vsel %vm156, %v174, 0.0
    %v178 = vrot.slane %v177, 4
    %v179 = vadd.f32 %v177, %v178
    %v180 = vrot.slane %v179, 2
    %v181 = vadd.f32 %v179, %v180
    %v182 = vrot.slane %v181, 1
    %v183 = vadd.f32 %v181, %v182
    %v184 = vsel %vm156, %v176, 0.0
    %v185 = vrot.slane %v184, 4
    %v186 = vadd.f32 %v184, %v185
    %v187 = vrot.slane %v186, 2
    %v188 = vadd.f32 %v186, %v187
    %v189 = vrot.slane %v188, 1
    %v190 = vadd.f32 %v188, %v189
    %v191 = vrcp.pop %v183
    %v192 = vmul.f32 %v174, %v191
    %v193 = vrcp.pop %v190
    %v194 = vmul.f32 %v176, %v193
    %v195 = vld [vmem:[#allocation5] sm:$0xf]
    %v196 = vld [vmem:[#allocation5 + $0x4] sm:$0xf]
    %v197 = vunpack.c.l.bf16 %v195
    %v198 = vunpack.c.l.bf16 %v196
    %200 = vset.pattern.permute.xlu0 0
    %201 = vperm.xlu0 %200, %v192
    %v202 = vpop.permute.xlu0 %201
    %205 = vset.pattern.permute.xlu0 0
    %206 = vperm.xlu0 %205, %v194
    %v207 = vpop.permute.xlu0 %206
    %v209 = vmul.f32 %v197, %v202
    %v210 = vmul.f32 %v198, %v207
    %v211 = vsel %vm83, %v209, 0.0
    %v212 = vrot.slane %v211, 4
    %v213 = vadd.f32 %v211, %v212
    %v214 = vrot.slane %v213, 2
    %v215 = vadd.f32 %v213, %v214
    %v216 = vrot.slane %v215, 1
    %v217 = vadd.f32 %v215, %v216
    %v218 = vsel %vm83, %v210, 0.0
    %v219 = vrot.slane %v218, 4
    %v220 = vadd.f32 %v218, %v219
    %v221 = vrot.slane %v220, 2
    %v222 = vadd.f32 %v220, %v221
    %v223 = vrot.slane %v222, 1
    %v224 = vadd.f32 %v222, %v223
    %vm227 = vcmask 1041409
    %v228 = vsel %vm227, %v224, %v217
    %vm230 = vcmask 254976
    %231 = vst.msk [vmem:[#allocation7] sm:$0x3] %vm230, %v228
    // Predicated region
    $region34: #{tpu_custom_call.1} parent=1 // pred_check
      _
    $region35: #{tpu_custom_call.1} parent=1 // pred_check_branch
      %233 = sbr.rel (0) target = $region37
    $region36: #{tpu_custom_call.1} parent=1 // pred_region
      %s235 = ssub.s32 32, 32
      %236 = vsyncadd [#allocation4], %s235
      %s238 = sshll.u32 [#allocation7], 4
      %s239 = int_to_ptr.vmem [resolvable:$true] %s238
      %241 = dma.vmem_to_hbm [thread:$0]  %s239, 32, %s6, [#allocation4]
    $region37: #{tpu_custom_call.1} parent=1 // pred_fallthru
      _
    // Predicated region
    $region38: #{tpu_custom_call.1} parent=1 // pred_check
      _
    $region39: #{tpu_custom_call.1} parent=1 // pred_check_branch
      %243 = sbr.rel (0) target = $region41
    $region40: #{tpu_custom_call.1} parent=1 // pred_region
      %244 = dma.done [#allocation4], 32
    $region41: #{tpu_custom_call.1} parent=1 // pred_fallthru
      _
    %245 = vsyncpa [#allocation3], 1
    %246 = vsyncpa [#allocation6], 1
    %247 = vsyncpa [#allocation4], 1

</llo_original>
